<compile_context>
chip_gen: v7x
topology: tpu7x:2x2x1
jax: 0.10.0
libtpu: 0.0.40
codegen_flags: <defaults>
</compile_context>

<pallas_src>
import functools

import jax
import jax.numpy as jnp
from jax.experimental import pallas as pl
from jax.experimental.pallas import tpu as pltpu


# --------------------------------------------------------------------------- #
# Kernel bodies
# --------------------------------------------------------------------------- #
def _conv_emit(o_ref, w_ref, b_ref, win_avg, win_max, *, filters, ksize, tb, tl):
    """Conv1d(2 -> filters, 'same') + sigmoid on a pooled window, as VPU FMAs.

    win_avg / win_max: (tb, tl + 2*pad) pooled windows (avg channel already carries
    the 1/C scale in its weights). Weights/bias are scalars in SMEM.
    """
    if filters <= 2 * ksize:
        # k outer / f inner: each shifted-window slice (lane realign) is computed once
        # and reused by every filter; `filters` accumulators stay live.
        accs = [jnp.zeros((tb, tl), jnp.float32) for _ in range(filters)]
        for k in range(ksize):
            a_tap = win_avg[:, k:k + tl]
            m_tap = win_max[:, k:k + tl]
            for f in range(filters):
                accs[f] = (accs[f]
                           + w_ref[(2 * f + 0) * ksize + k] * a_tap
                           + w_ref[(2 * f + 1) * ksize + k] * m_tap)
        for f in range(filters):
            o_ref[:, f, :] = jax.nn.sigmoid(accs[f] + b_ref[f]).astype(o_ref.dtype)
    else:
        # f outer with hoisted taps: 2K live taps, one accumulator.
        avg_taps = [win_avg[:, k:k + tl] for k in range(ksize)]
        max_taps = [win_max[:, k:k + tl] for k in range(ksize)]
        for f in range(filters):
            acc = jnp.zeros((tb, tl), jnp.float32)
            for k in range(ksize):
                acc = (acc
                       + w_ref[(2 * f + 0) * ksize + k] * avg_taps[k]
                       + w_ref[(2 * f + 1) * ksize + k] * max_taps[k])
            o_ref[:, f, :] = jax.nn.sigmoid(acc + b_ref[f]).astype(o_ref.dtype)


def _direct_kernel(x_ref, w_ref, b_ref, o_ref, *, filters, ksize, tb, tl):
    """Single-step path: whole L fits in one tile, or pad == 0 (no cross-tile halo)."""
    pad = ksize // 2
    x = x_ref[...].astype(jnp.float32)            # (tb, C, tl)
    cur_sum = jnp.sum(x, axis=1)                  # 1/C folded into avg conv weights
    cur_max = jnp.max(x, axis=1)
    if pad > 0:
        z = jnp.zeros((tb, pad), jnp.float32)
        win_avg = jnp.concatenate([z, cur_sum, z], axis=-1)
        win_max = jnp.concatenate([z, cur_max, z], axis=-1)
    else:
        win_avg, win_max = cur_sum, cur_max
    _conv_emit(o_ref, w_ref, b_ref, win_avg, win_max,
               filters=filters, ksize=ksize, tb=tb, tl=tl)


def _lag_kernel(x_ref, w_ref, b_ref, o_ref,
                prev_avg, prev_max, carry_avg, carry_max,
                *, filters, ksize, tb, tl):
    """Multi-L-tile path (pad > 0): one-tile output lag with a pooled-column carry."""
    j = pl.program_id(1)
    n_steps = pl.num_programs(1)                  # == n_l + 1 (last step is the flush)
    pad = ksize // 2

    @pl.when(j < n_steps - 1)
    def _pool_step():
        # Pool the tile loaded at this step. The flush step skips this entirely
        # (its x block index repeats, so Pallas also skips the DMA).
        x = x_ref[...].astype(jnp.float32)        # (tb, C, tl)
        cur_sum = jnp.sum(x, axis=1)
        cur_max = jnp.max(x, axis=1)

        @pl.when(j == 0)
        def _init_carry():                        # left halo of tile 0 is zeros
            carry_avg[...] = jnp.zeros_like(carry_avg)
            carry_max[...] = jnp.zeros_like(carry_max)

        @pl.when(j > 0)
        def _emit():                              # emit output tile (j - 1)
            win_avg = jnp.concatenate(
                [carry_avg[...], prev_avg[...], cur_sum[:, :pad]], axis=-1)
            win_max = jnp.concatenate(
                [carry_max[...], prev_max[...], cur_max[:, :pad]], axis=-1)
            _conv_emit(o_ref, w_ref, b_ref, win_avg, win_max,
                       filters=filters, ksize=ksize, tb=tb, tl=tl)
            # Save tile (j-1)'s right edge as the next tile's left halo.
            # Ref-sliced: loads only `pad` lanes, not the whole (tb, tl) tile.
            carry_avg[...] = prev_avg[:, tl - pad:]
            carry_max[...] = prev_max[:, tl - pad:]

        prev_avg[...] = cur_sum
        prev_max[...] = cur_max

    @pl.when(j == n_steps - 1)
    def _flush():
        # Last output tile: zero right halo (the conv's "same" zero padding).
        zeros = jnp.zeros((tb, pad), jnp.float32)
        win_avg = jnp.concatenate([carry_avg[...], prev_avg[...], zeros], axis=-1)
        win_max = jnp.concatenate([carry_max[...], prev_max[...], zeros], axis=-1)
        _conv_emit(o_ref, w_ref, b_ref, win_avg, win_max,
                   filters=filters, ksize=ksize, tb=tb, tl=tl)


# --------------------------------------------------------------------------- #
# Tile-size / budget heuristics
# --------------------------------------------------------------------------- #
def _vmem_budget_bytes():
    """Generation-aware usable VMEM (with headroom): ~54 MiB v7x, ~109 MiB v5e/v6e."""
    cap = 64 * 1024 * 1024
    try:
        info = pltpu.get_tpu_info()
        cap = int(getattr(info, "vmem_capacity_bytes", cap))
    except Exception:
        pass
    cap = min(max(cap, 32 * 1024 * 1024), 128 * 1024 * 1024)
    return int(cap * 0.85)


def _pick_tb(batch):
    """Sublane-dense batch tile (up to 8 for f32) that divides B exactly; relax only
    to keep >= 2 batch tiles for the 'parallel' axis (dual-TensorCore chips)."""
    tb = min(8, batch)
    while batch % tb != 0:
        tb -= 1
    if batch // tb < 2:
        for cand in range(tb // 2, 0, -1):        # give up at most half the density
            if batch % cand == 0:
                tb = cand
                break
    return max(tb, 1)


def _pick_tl(length, *, tb, channels, filters, ksize, x_bytes, out_bytes,
             budget, tl_cap):
    """L tile from a VMEM budget and a vreg-pressure cap; must divide L (or be L)."""
    # VMEM: double-buffered x + out blocks, lag scratch, 1 MiB slack for internals.
    per_tl = 2 * tb * channels * x_bytes + 2 * tb * filters * out_bytes + 2 * tb * 4
    tl_vmem = max((budget - (1 << 20)) // max(per_tl, 1), 128)
    # vregs: window(2) + live taps/accumulators + working set, per 128 output lanes.
    live = 4 + min(filters, 2 * ksize)
    tl_vreg = 128 * max(1, 48 // live)
    cap = max(128, min(tl_cap, tl_vmem, tl_vreg))
    if length <= cap:
        return length                              # single tile (full-dim block)
    t = (cap // 128) * 128
    while t >= 128:
        if length % t == 0:
            return t
        t -= 128
    # TODO(synk): mask a ragged last L-tile so lengths not divisible by 128 can be
    # tiled; until then fall back to one full-length tile.
    return length


# --------------------------------------------------------------------------- #
# Wrapper
# --------------------------------------------------------------------------- #
def spatial_gate(x, weight, bias, *, kernel_size, tb=None, tl_cap=1024,
                 transpose=False):
    """x: (B, C, L). weight: (filters, 2, K) Conv1d weight. bias: (filters,)."""
    if transpose:
        x = jnp.swapaxes(x, 1, 2)

    B, C, L = x.shape
    filters = weight.shape[0]
    assert kernel_size % 2 == 1, "odd kernel_size required for 'same' output length"
    assert weight.shape == (filters, 2, kernel_size)
    pad = kernel_size // 2

    if tb is None:
        tb = _pick_tb(B)
    else:
        tb = max(1, min(tb, B))
        while B % tb != 0:                         # avoid ragged batch blocks
            tb -= 1
    n_b = B // tb

    budget = _vmem_budget_bytes()
    x_bytes = jnp.dtype(x.dtype).itemsize
    out_bytes = x_bytes
    tl = _pick_tl(L, tb=tb, channels=C, filters=filters, ksize=kernel_size,
                  x_bytes=x_bytes, out_bytes=out_bytes, budget=budget, tl_cap=tl_cap)
    assert L % tl == 0
    n_l = L // tl

    use_lag = (n_l > 1) and (pad > 0)
    if use_lag:
        assert pad <= tl, "halo carry requires pad <= tile length"
    n_steps = n_l + 1 if use_lag else n_l

    # Fold 1/C of the channel mean into the avg-channel conv weights (kernel sums).
    w_scaled = weight.astype(jnp.float32) * jnp.array(
        [1.0 / C, 1.0], jnp.float32)[None, :, None]
    w_flat = w_scaled.reshape(-1)                  # (filters * 2 * K,)  -> SMEM
    b_flat = bias.reshape(-1).astype(jnp.float32)  # (filters,)          -> SMEM

    # Per-step VMEM estimate (double-buffered x/out blocks + scratch + slack);
    # tl was derived from `budget`, so this stays within the generation-aware cap.
    est = (2 * tb * C * tl * x_bytes
           + 2 * tb * filters * tl * out_bytes
           + (2 * tb * tl + 2 * tb * max(pad, 1)) * 4
           + (1 << 20))
    vmem_limit = int(min(max(2 * est, 32 * 1024 * 1024), budget))

    if use_lag:
        kernel = functools.partial(_lag_kernel, filters=filters, ksize=kernel_size,
                                   tb=tb, tl=tl)
        in_x_map = lambda b, j: (b, 0, jnp.minimum(j, n_l - 1))
        out_map = lambda b, j: (b, 0, jnp.maximum(j - 1, 0))
        scratch = [pltpu.VMEM((tb, tl), jnp.float32),   # previous tile pooled sum
                   pltpu.VMEM((tb, tl), jnp.float32),   # previous tile pooled max
                   pltpu.VMEM((tb, pad), jnp.float32),  # left-halo carry (sum)
                   pltpu.VMEM((tb, pad), jnp.float32)]  # left-halo carry (max)
    else:
        kernel = functools.partial(_direct_kernel, filters=filters, ksize=kernel_size,
                                   tb=tb, tl=tl)
        in_x_map = lambda b, j: (b, 0, j)
        out_map = lambda b, j: (b, 0, j)
        scratch = []

    out = pl.pallas_call(
        kernel,
        out_shape=jax.ShapeDtypeStruct((B, filters, L), x.dtype),
        grid_spec=pltpu.PrefetchScalarGridSpec(
            num_scalar_prefetch=0,
            grid=(n_b, n_steps),
            in_specs=[
                pl.BlockSpec((tb, C, tl), in_x_map),
                pl.BlockSpec(memory_space=pltpu.MemorySpace.SMEM),   # conv weight
                pl.BlockSpec(memory_space=pltpu.MemorySpace.SMEM),   # conv bias
            ],
            out_specs=pl.BlockSpec((tb, filters, tl), out_map),
            scratch_shapes=scratch,
        ),
        compiler_params=pltpu.CompilerParams(
            dimension_semantics=("parallel", "arbitrary"),
            vmem_limit_bytes=vmem_limit,
        ),
    )(x, w_flat, b_flat)

    if transpose:
        out = jnp.swapaxes(out, 1, 2)
    return out


# --------------------------------------------------------------------------- #
# Pure-JAX reference (verification)
# --------------------------------------------------------------------------- #
def spatial_gate_ref(x, weight, bias, *, kernel_size):
    avg = jnp.mean(x, axis=1, keepdims=True)
    mx = jnp.max(x, axis=1, keepdims=True)
    pooled = jnp.concatenate([avg, mx], axis=1)              # (B, 2, L)
    pad = kernel_size // 2
    padded = jnp.pad(pooled, ((0, 0), (0, 0), (pad, pad)))
    B, _, L = x.shape
    filters = weight.shape[0]
    out = jnp.zeros((B, filters, L), jnp.float32)
    for k in range(kernel_size):
        out = out + jnp.einsum("bcl,fc->bfl", padded[:, :, k:k + L], weight[:, :, k])
    out = out + bias[None, :, None]
    return jax.nn.sigmoid(out)


if __name__ == "__main__":
    def _make_inputs(key, B, C, L, filters, kernel_size):
        kx, kw, kb = jax.random.split(key, 3)
        x = jax.random.normal(kx, (B, C, L), dtype=jnp.float32)
        fan_in = 2 * kernel_size
        bound = 1.0 / (fan_in ** 0.5)
        weight = jax.random.uniform(kw, (filters, 2, kernel_size),
                                    minval=-bound, maxval=bound, dtype=jnp.float32)
        bias = jax.random.uniform(kb, (filters,), minval=-bound, maxval=bound,
                                  dtype=jnp.float32)
        return x, weight, bias

    key = jax.random.PRNGKey(0)
    k1, k2, k3, k4 = jax.random.split(key, 4)

    # Case 1: module config SpatialGate(filters=4, kernel_size=3), small shapes
    # (single L tile -> direct path).
    B, C, L, filters, ks = 2, 4, 16, 4, 3
    x, w, b = _make_inputs(k1, B, C, L, filters, ks)
    out = jax.block_until_ready(spatial_gate(x, w, b, kernel_size=ks))
    ref = spatial_gate_ref(x, w, b, kernel_size=ks)
    assert out.shape == (B, filters, L)
    assert jnp.allclose(out, ref, atol=1e-5, rtol=1e-5), "case 1 mismatch vs reference"

    # Case 2: L-tiled lag path (tl=128 -> 2 tiles, carried halo, K=7).
    B, C, L, filters, ks = 2, 8, 256, 6, 7
    x, w, b = _make_inputs(k2, B, C, L, filters, ks)
    out = jax.block_until_ready(spatial_gate(x, w, b, kernel_size=ks, tl_cap=128))
    ref = spatial_gate_ref(x, w, b, kernel_size=ks)
    assert out.shape == (B, filters, L)
    assert jnp.allclose(out, ref, atol=1e-5, rtol=1e-5), "case 2 mismatch vs reference"

    # Case 3: sublane-dense batch tile (tb=8, 2 batch tiles) + lag path.
    B, C, L, filters, ks = 16, 8, 256, 4, 3
    x, w, b = _make_inputs(k3, B, C, L, filters, ks)
    out = jax.block_until_ready(spatial_gate(x, w, b, kernel_size=ks, tl_cap=128))
    ref = spatial_gate_ref(x, w, b, kernel_size=ks)
    assert out.shape == (B, filters, L)
    assert jnp.allclose(out, ref, atol=1e-5, rtol=1e-5), "case 3 mismatch vs reference"

    # Case 4: kernel_size=1 (pad=0) with multiple L tiles -> direct multi-tile path.
    B, C, L, filters, ks = 2, 4, 256, 3, 1
    x, w, b = _make_inputs(k4, B, C, L, filters, ks)
    out = jax.block_until_ready(spatial_gate(x, w, b, kernel_size=ks, tl_cap=128))
    ref = spatial_gate_ref(x, w, b, kernel_size=ks)
    assert out.shape == (B, filters, L)
    assert jnp.allclose(out, ref, atol=1e-5, rtol=1e-5), "case 4 mismatch vs reference"

    print("KERNEL_OK")
</pallas_src>

<mosaic_0001>
module attributes {stable_mosaic.version = 11 : i64} {
  func.func @_direct_kernel(%arg0: i32, %arg1: i32, %arg2: memref<1x4x16xf32, #tpu.memory_space<vmem>>, %arg3: memref<24xf32, #tpu.memory_space<smem>>, %arg4: memref<4xf32, #tpu.memory_space<smem>>, %arg5: memref<1x4x16xf32, #tpu.memory_space<vmem>>) attributes {dimension_semantics = [#tpu.dimension_semantics<parallel>, #tpu.dimension_semantics<arbitrary>], iteration_bounds = array<i64: 2, 1>, scalar_prefetch = 0 : i64, scratch_operands = 0 : i64, tpu.core_type = #tpu.core_type<tc>, window_params = [{transform_indices = @transform_0, window_bounds = array<i64: 1, 4, 16>}, {transform_indices = @transform_1, window_bounds = array<i64: 24>}, {transform_indices = @transform_2, window_bounds = array<i64: 4>}, {transform_indices = @transform_3, window_bounds = array<i64: 1, 4, 16>}]} {
    %c0 = arith.constant 0 : index
    %c0_0 = arith.constant 0 : index
    %c0_1 = arith.constant 0 : index
    %0 = vector.load %arg2[%c0, %c0_0, %c0_1] : memref<1x4x16xf32, #tpu.memory_space<vmem>>, vector<1x4x16xf32>
    %cst = arith.constant dense<0.000000e+00> : vector<1x16xf32>
    %1 = vector.multi_reduction <add>, %0, %cst [1] : vector<1x4x16xf32> to vector<1x16xf32>
    %cst_2 = arith.constant dense<0xFF800000> : vector<1x16xf32>
    %2 = vector.multi_reduction <maximumf>, %0, %cst_2 [1] : vector<1x4x16xf32> to vector<1x16xf32>
    %cst_3 = arith.constant 0.000000e+00 : f32
    %3 = vector.broadcast %cst_3 : f32 to vector<1x1xf32>
    %4 = tpu.concatenate %3, %1, %3 in 1 : vector<1x1xf32>, vector<1x16xf32>, vector<1x1xf32> -> vector<1x18xf32>
    %5 = tpu.concatenate %3, %2, %3 in 1 : vector<1x1xf32>, vector<1x16xf32>, vector<1x1xf32> -> vector<1x18xf32>
    %cst_4 = arith.constant 0.000000e+00 : f32
    %6 = vector.broadcast %cst_4 : f32 to vector<1x16xf32>
    %cst_5 = arith.constant 0.000000e+00 : f32
    %7 = vector.broadcast %cst_5 : f32 to vector<1x16xf32>
    %cst_6 = arith.constant 0.000000e+00 : f32
    %8 = vector.broadcast %cst_6 : f32 to vector<1x16xf32>
    %cst_7 = arith.constant 0.000000e+00 : f32
    %9 = vector.broadcast %cst_7 : f32 to vector<1x16xf32>
    %10 = vector.extract_strided_slice %4 {offsets = [0, 0], sizes = [1, 16], strides = [1, 1]} : vector<1x18xf32> to vector<1x16xf32>
    %11 = vector.extract_strided_slice %5 {offsets = [0, 0], sizes = [1, 16], strides = [1, 1]} : vector<1x18xf32> to vector<1x16xf32>
    %c0_8 = arith.constant 0 : index
    %12 = memref.load %arg3[%c0_8] : memref<24xf32, #tpu.memory_space<smem>>
    %13 = vector.broadcast %12 : f32 to vector<1x16xf32>
    %14 = arith.mulf %13, %10 : vector<1x16xf32>
    %15 = arith.addf %6, %14 : vector<1x16xf32>
    %c3 = arith.constant 3 : index
    %16 = memref.load %arg3[%c3] : memref<24xf32, #tpu.memory_space<smem>>
    %17 = vector.broadcast %16 : f32 to vector<1x16xf32>
    %18 = arith.mulf %17, %11 : vector<1x16xf32>
    %19 = arith.addf %15, %18 : vector<1x16xf32>
    %c6 = arith.constant 6 : index
    %20 = memref.load %arg3[%c6] : memref<24xf32, #tpu.memory_space<smem>>
    %21 = vector.broadcast %20 : f32 to vector<1x16xf32>
    %22 = arith.mulf %21, %10 : vector<1x16xf32>
    %23 = arith.addf %7, %22 : vector<1x16xf32>
    %c9 = arith.constant 9 : index
    %24 = memref.load %arg3[%c9] : memref<24xf32, #tpu.memory_space<smem>>
    %25 = vector.broadcast %24 : f32 to vector<1x16xf32>
    %26 = arith.mulf %25, %11 : vector<1x16xf32>
    %27 = arith.addf %23, %26 : vector<1x16xf32>
    %c12 = arith.constant 12 : index
    %28 = memref.load %arg3[%c12] : memref<24xf32, #tpu.memory_space<smem>>
    %29 = vector.broadcast %28 : f32 to vector<1x16xf32>
    %30 = arith.mulf %29, %10 : vector<1x16xf32>
    %31 = arith.addf %8, %30 : vector<1x16xf32>
    %c15 = arith.constant 15 : index
    %32 = memref.load %arg3[%c15] : memref<24xf32, #tpu.memory_space<smem>>
    %33 = vector.broadcast %32 : f32 to vector<1x16xf32>
    %34 = arith.mulf %33, %11 : vector<1x16xf32>
    %35 = arith.addf %31, %34 : vector<1x16xf32>
    %c18 = arith.constant 18 : index
    %36 = memref.load %arg3[%c18] : memref<24xf32, #tpu.memory_space<smem>>
    %37 = vector.broadcast %36 : f32 to vector<1x16xf32>
    %38 = arith.mulf %37, %10 : vector<1x16xf32>
    %39 = arith.addf %9, %38 : vector<1x16xf32>
    %c21 = arith.constant 21 : index
    %40 = memref.load %arg3[%c21] : memref<24xf32, #tpu.memory_space<smem>>
    %41 = vector.broadcast %40 : f32 to vector<1x16xf32>
    %42 = arith.mulf %41, %11 : vector<1x16xf32>
    %43 = arith.addf %39, %42 : vector<1x16xf32>
    %44 = vector.extract_strided_slice %4 {offsets = [0, 1], sizes = [1, 16], strides = [1, 1]} : vector<1x18xf32> to vector<1x16xf32>
    %45 = vector.extract_strided_slice %5 {offsets = [0, 1], sizes = [1, 16], strides = [1, 1]} : vector<1x18xf32> to vector<1x16xf32>
    %c1 = arith.constant 1 : index
    %46 = memref.load %arg3[%c1] : memref<24xf32, #tpu.memory_space<smem>>
    %47 = vector.broadcast %46 : f32 to vector<1x16xf32>
    %48 = arith.mulf %47, %44 : vector<1x16xf32>
    %49 = arith.addf %19, %48 : vector<1x16xf32>
    %c4 = arith.constant 4 : index
    %50 = memref.load %arg3[%c4] : memref<24xf32, #tpu.memory_space<smem>>
    %51 = vector.broadcast %50 : f32 to vector<1x16xf32>
    %52 = arith.mulf %51, %45 : vector<1x16xf32>
    %53 = arith.addf %49, %52 : vector<1x16xf32>
    %c7 = arith.constant 7 : index
    %54 = memref.load %arg3[%c7] : memref<24xf32, #tpu.memory_space<smem>>
    %55 = vector.broadcast %54 : f32 to vector<1x16xf32>
    %56 = arith.mulf %55, %44 : vector<1x16xf32>
    %57 = arith.addf %27, %56 : vector<1x16xf32>
    %c10 = arith.constant 10 : index
    %58 = memref.load %arg3[%c10] : memref<24xf32, #tpu.memory_space<smem>>
    %59 = vector.broadcast %58 : f32 to vector<1x16xf32>
    %60 = arith.mulf %59, %45 : vector<1x16xf32>
    %61 = arith.addf %57, %60 : vector<1x16xf32>
    %c13 = arith.constant 13 : index
    %62 = memref.load %arg3[%c13] : memref<24xf32, #tpu.memory_space<smem>>
    %63 = vector.broadcast %62 : f32 to vector<1x16xf32>
    %64 = arith.mulf %63, %44 : vector<1x16xf32>
    %65 = arith.addf %35, %64 : vector<1x16xf32>
    %c16 = arith.constant 16 : index
    %66 = memref.load %arg3[%c16] : memref<24xf32, #tpu.memory_space<smem>>
    %67 = vector.broadcast %66 : f32 to vector<1x16xf32>
    %68 = arith.mulf %67, %45 : vector<1x16xf32>
    %69 = arith.addf %65, %68 : vector<1x16xf32>
    %c19 = arith.constant 19 : index
    %70 = memref.load %arg3[%c19] : memref<24xf32, #tpu.memory_space<smem>>
    %71 = vector.broadcast %70 : f32 to vector<1x16xf32>
    %72 = arith.mulf %71, %44 : vector<1x16xf32>
    %73 = arith.addf %43, %72 : vector<1x16xf32>
    %c22 = arith.constant 22 : index
    %74 = memref.load %arg3[%c22] : memref<24xf32, #tpu.memory_space<smem>>
    %75 = vector.broadcast %74 : f32 to vector<1x16xf32>
    %76 = arith.mulf %75, %45 : vector<1x16xf32>
    %77 = arith.addf %73, %76 : vector<1x16xf32>
    %78 = vector.extract_strided_slice %4 {offsets = [0, 2], sizes = [1, 16], strides = [1, 1]} : vector<1x18xf32> to vector<1x16xf32>
    %79 = vector.extract_strided_slice %5 {offsets = [0, 2], sizes = [1, 16], strides = [1, 1]} : vector<1x18xf32> to vector<1x16xf32>
    %c2 = arith.constant 2 : index
    %80 = memref.load %arg3[%c2] : memref<24xf32, #tpu.memory_space<smem>>
    %81 = vector.broadcast %80 : f32 to vector<1x16xf32>
    %82 = arith.mulf %81, %78 : vector<1x16xf32>
    %83 = arith.addf %53, %82 : vector<1x16xf32>
    %c5 = arith.constant 5 : index
    %84 = memref.load %arg3[%c5] : memref<24xf32, #tpu.memory_space<smem>>
    %85 = vector.broadcast %84 : f32 to vector<1x16xf32>
    %86 = arith.mulf %85, %79 : vector<1x16xf32>
    %87 = arith.addf %83, %86 : vector<1x16xf32>
    %c8 = arith.constant 8 : index
    %88 = memref.load %arg3[%c8] : memref<24xf32, #tpu.memory_space<smem>>
    %89 = vector.broadcast %88 : f32 to vector<1x16xf32>
    %90 = arith.mulf %89, %78 : vector<1x16xf32>
    %91 = arith.addf %61, %90 : vector<1x16xf32>
    %c11 = arith.constant 11 : index
    %92 = memref.load %arg3[%c11] : memref<24xf32, #tpu.memory_space<smem>>
    %93 = vector.broadcast %92 : f32 to vector<1x16xf32>
    %94 = arith.mulf %93, %79 : vector<1x16xf32>
    %95 = arith.addf %91, %94 : vector<1x16xf32>
    %c14 = arith.constant 14 : index
    %96 = memref.load %arg3[%c14] : memref<24xf32, #tpu.memory_space<smem>>
    %97 = vector.broadcast %96 : f32 to vector<1x16xf32>
    %98 = arith.mulf %97, %78 : vector<1x16xf32>
    %99 = arith.addf %69, %98 : vector<1x16xf32>
    %c17 = arith.constant 17 : index
    %100 = memref.load %arg3[%c17] : memref<24xf32, #tpu.memory_space<smem>>
    %101 = vector.broadcast %100 : f32 to vector<1x16xf32>
    %102 = arith.mulf %101, %79 : vector<1x16xf32>
    %103 = arith.addf %99, %102 : vector<1x16xf32>
    %c20 = arith.constant 20 : index
    %104 = memref.load %arg3[%c20] : memref<24xf32, #tpu.memory_space<smem>>
    %105 = vector.broadcast %104 : f32 to vector<1x16xf32>
    %106 = arith.mulf %105, %78 : vector<1x16xf32>
    %107 = arith.addf %77, %106 : vector<1x16xf32>
    %c23 = arith.constant 23 : index
    %108 = memref.load %arg3[%c23] : memref<24xf32, #tpu.memory_space<smem>>
    %109 = vector.broadcast %108 : f32 to vector<1x16xf32>
    %110 = arith.mulf %109, %79 : vector<1x16xf32>
    %111 = arith.addf %107, %110 : vector<1x16xf32>
    %c0_9 = arith.constant 0 : index
    %112 = memref.load %arg4[%c0_9] : memref<4xf32, #tpu.memory_space<smem>>
    %113 = vector.broadcast %112 : f32 to vector<1x16xf32>
    %114 = arith.addf %87, %113 : vector<1x16xf32>
    %115 = arith.negf %114 : vector<1x16xf32>
    %116 = math.exp %115 : vector<1x16xf32>
    %cst_10 = arith.constant 1.000000e+00 : f32
    %117 = vector.broadcast %cst_10 : f32 to vector<1x16xf32>
    %118 = arith.addf %117, %116 : vector<1x16xf32>
    %119 = arith.divf %117, %118 : vector<1x16xf32>
    %c0_11 = arith.constant 0 : index
    %c0_12 = arith.constant 0 : index
    %c0_13 = arith.constant 0 : index
    %120 = vector.load %arg5[%c0_11, %c0_12, %c0_13] : memref<1x4x16xf32, #tpu.memory_space<vmem>>, vector<1x1x16xf32>
    %121 = vector.shape_cast %120 : vector<1x1x16xf32> to vector<1x16xf32>
    %122 = vector.shape_cast %119 : vector<1x16xf32> to vector<1x1x16xf32>
    tpu.vector_store %arg5[%c0_11, %c0_12, %c0_13], %122 {strides = array<i32>} : memref<1x4x16xf32, #tpu.memory_space<vmem>>, vector<1x1x16xf32>,
    %c1_14 = arith.constant 1 : index
    %123 = memref.load %arg4[%c1_14] : memref<4xf32, #tpu.memory_space<smem>>
    %124 = vector.broadcast %123 : f32 to vector<1x16xf32>
    %125 = arith.addf %95, %124 : vector<1x16xf32>
    %126 = arith.negf %125 : vector<1x16xf32>
    %127 = math.exp %126 : vector<1x16xf32>
    %cst_15 = arith.constant 1.000000e+00 : f32
    %128 = vector.broadcast %cst_15 : f32 to vector<1x16xf32>
    %129 = arith.addf %128, %127 : vector<1x16xf32>
    %130 = arith.divf %128, %129 : vector<1x16xf32>
    %c0_16 = arith.constant 0 : index
    %c1_17 = arith.constant 1 : index
    %c0_18 = arith.constant 0 : index
    %131 = vector.load %arg5[%c0_16, %c1_17, %c0_18] : memref<1x4x16xf32, #tpu.memory_space<vmem>>, vector<1x1x16xf32>
    %132 = vector.shape_cast %131 : vector<1x1x16xf32> to vector<1x16xf32>
    %133 = vector.shape_cast %130 : vector<1x16xf32> to vector<1x1x16xf32>
    tpu.vector_store %arg5[%c0_16, %c1_17, %c0_18], %133 {strides = array<i32>} : memref<1x4x16xf32, #tpu.memory_space<vmem>>, vector<1x1x16xf32>,
    %c2_19 = arith.constant 2 : index
    %134 = memref.load %arg4[%c2_19] : memref<4xf32, #tpu.memory_space<smem>>
    %135 = vector.broadcast %134 : f32 to vector<1x16xf32>
    %136 = arith.addf %103, %135 : vector<1x16xf32>
    %137 = arith.negf %136 : vector<1x16xf32>
    %138 = math.exp %137 : vector<1x16xf32>
    %cst_20 = arith.constant 1.000000e+00 : f32
    %139 = vector.broadcast %cst_20 : f32 to vector<1x16xf32>
    %140 = arith.addf %139, %138 : vector<1x16xf32>
    %141 = arith.divf %139, %140 : vector<1x16xf32>
    %c0_21 = arith.constant 0 : index
    %c2_22 = arith.constant 2 : index
    %c0_23 = arith.constant 0 : index
    %142 = vector.load %arg5[%c0_21, %c2_22, %c0_23] : memref<1x4x16xf32, #tpu.memory_space<vmem>>, vector<1x1x16xf32>
    %143 = vector.shape_cast %142 : vector<1x1x16xf32> to vector<1x16xf32>
    %144 = vector.shape_cast %141 : vector<1x16xf32> to vector<1x1x16xf32>
    tpu.vector_store %arg5[%c0_21, %c2_22, %c0_23], %144 {strides = array<i32>} : memref<1x4x16xf32, #tpu.memory_space<vmem>>, vector<1x1x16xf32>,
    %c3_24 = arith.constant 3 : index
    %145 = memref.load %arg4[%c3_24] : memref<4xf32, #tpu.memory_space<smem>>
    %146 = vector.broadcast %145 : f32 to vector<1x16xf32>
    %147 = arith.addf %111, %146 : vector<1x16xf32>
    %148 = arith.negf %147 : vector<1x16xf32>
    %149 = math.exp %148 : vector<1x16xf32>
    %cst_25 = arith.constant 1.000000e+00 : f32
    %150 = vector.broadcast %cst_25 : f32 to vector<1x16xf32>
    %151 = arith.addf %150, %149 : vector<1x16xf32>
    %152 = arith.divf %150, %151 : vector<1x16xf32>
    %c0_26 = arith.constant 0 : index
    %c3_27 = arith.constant 3 : index
    %c0_28 = arith.constant 0 : index
    %153 = vector.load %arg5[%c0_26, %c3_27, %c0_28] : memref<1x4x16xf32, #tpu.memory_space<vmem>>, vector<1x1x16xf32>
    %154 = vector.shape_cast %153 : vector<1x1x16xf32> to vector<1x16xf32>
    %155 = vector.shape_cast %152 : vector<1x16xf32> to vector<1x1x16xf32>
    tpu.vector_store %arg5[%c0_26, %c3_27, %c0_28], %155 {strides = array<i32>} : memref<1x4x16xf32, #tpu.memory_space<vmem>>, vector<1x1x16xf32>,
    return
  }
  func.func @transform_0(%arg0: i32, %arg1: i32) -> (i32, i32, i32) {
    %c0_i32 = arith.constant 0 : i32
    %c0_i32_0 = arith.constant 0 : i32
    return %arg0, %c0_i32, %arg1 : i32, i32, i32
  }
  func.func @transform_1(%arg0: i32, %arg1: i32) -> i32 {
    %c0_i32 = arith.constant 0 : i32
    %c0_i32_0 = arith.constant 0 : i32
    return %c0_i32 : i32
  }
  func.func @transform_2(%arg0: i32, %arg1: i32) -> i32 {
    %c0_i32 = arith.constant 0 : i32
    %c0_i32_0 = arith.constant 0 : i32
    return %c0_i32 : i32
  }
  func.func @transform_3(%arg0: i32, %arg1: i32) -> (i32, i32, i32) {
    %c0_i32 = arith.constant 0 : i32
    %c0_i32_0 = arith.constant 0 : i32
    return %arg0, %c0_i32, %arg1 : i32, i32, i32
  }
}

</mosaic_0001>

<llo_original>
// kernel: tpu_custom_call.1
$region0: #{tpu_custom_call.1}
  #allocation0 [shape = 'u32[]', space=smem, size = 0x4, offset = 0x4, fixed_abs, tag = 'smem constant byte address 0x4 - core index']
  #allocation1 [shape = 'u32[144,128]{1,0:T(1,128)}', space=vmem, size = 0x12000, scoped, tag = 'internal scratch']
  %s0 = inlined_call_operand.hbm [shape: f32[2,4,16], index: 0, kind: input, shape index: {}]
  %s1 = inlined_call_operand.vmem [shape: f32[24], index: 1, kind: input, shape index: {}]
  %s2 = inlined_call_operand.vmem [shape: f32[4], index: 2, kind: input, shape index: {}]
  %s3 = inlined_call_operand.hbm [shape: f32[2,4,16], index: 3, kind: output, shape index: {}]
  %s4 = sld [smem:[#allocation0]]
  $region57: #{tpu_custom_call.1} parent=0
    _
  %s6 = ssub.s32 1, %s4
  %s7 = scalar_select 0, %s6, %s4
  $region1: #{tpu_custom_call.1} parent=0
    #allocation2 [shape = 'u8[4096]{0}', space=vmem, size = 0x1000, scoped, tag = 'input window, operand 0']
    #allocation3 [shape = 's32[2]{0}', space=sflag, size = 0x8, scoped, tag = 'scoped memory for tpu_custom_call.1']
    #allocation4 [shape = 's32[2]{0}', space=sflag, size = 0x8, scoped, tag = 'scoped memory for tpu_custom_call.1']
    #allocation5 [shape = 's32[2]{0}', space=sflag, size = 0x8, scoped, tag = 'scoped memory for tpu_custom_call.1']
    #allocation6 [shape = 'u8[512]{0}', space=smem, size = 0x200, scoped, tag = 'input window, operand 1, single buffered']
    #allocation7 [shape = 'u8[512]{0}', space=smem, size = 0x200, scoped, tag = 'input window, operand 2, single buffered']
    #allocation8 [shape = 's32[1]{0}', space=sflag, size = 0x4, scoped, tag = 'scoped memory for tpu_custom_call.1']
    #allocation9 [shape = 'u8[4096]{0}', space=vmem, size = 0x1000, scoped, tag = 'output window, operand 0']
    %8 = vsyncpa [#allocation3], 0
    %s9 = scalar_lea.sflag [#allocation3], 1
    %10 = vsyncpa %s9, 0
    %11 = vsyncpa [#allocation5], 0
    %12 = vsyncpa [#allocation8], 0
    %13 = vsyncpa [#allocation4], 0
    %s14 = scalar_lea.sflag [#allocation4], 1
    %15 = vsyncpa %s14, 0
    loop: start=0, step=1, limit=4
    $region2: #{tpu_custom_call.1} parent=1 // loop_pre_header
      _
    $region3: #{tpu_custom_call.1} parent=1 // loop_header
      %s17 = sphi 0, %s21
      %p18 = scmp.ge.s32.totalorder %s17, 4
      %s24 = sphi 0, %s36
      %s25 = sphi 0, %s32
      %s26 = sphi 0, %s24
      %s27 = sphi 0, %s25
      %s28 = sphi 0, %s26
      %s29 = sphi 0, %s27
      %s41 = sphi 0, %s43
      %s44 = sphi 0, %s41
      %s45 = sphi 0, %s44
      %s61 = sphi 0, %s45
      %s65 = sphi 0, %s65
      %s67 = sphi 0, %s65
      %s68 = sphi 0, %s67
      %s82 = sphi 0, %s68
      %s86 = sphi 0, %s86
      %s88 = sphi 0, %s86
      %s89 = sphi 0, %s88
      %s103 = sphi 0, %s89
      %s111 = sphi 0, %s113
      %s114 = sphi 0, %s111
      %s115 = sphi 0, %s114
      %s131 = sphi 0, %s115
    $region4: #{tpu_custom_call.1} parent=1 // loop_header_branch
      %20 = sbr.rel (%p18) target = $region8
    $region5: #{tpu_custom_call.1} parent=1 // loop_body
      %s22 = ssub.s32 %s17, 1
      %s23 = ssub.s32 %s17, 2
      %s30 = sadd.s32 1, %s25
      %p31 = scmp.ge.s32.totalorder %s30, 1
      %s32 = scalar_select %p31, 0, %s30
      %s33 = sadd.s32 1, %s24
      %s34 = scalar_select %p31, %s33, %s24
      %p35 = scmp.ge.s32.totalorder %s34, 2
      %s36 = scalar_select %p35, 0, %s34
      %s37 = ssub.s32 %s24, %s36
      %s38 = ssub.s32 %s25, %s32
      %s39 = sor.u32 %s37, %s38
      %p40 = scmp.eq.s32.totalorder %s39, 0
      %s42 = sadd.s32 %s41, 1
      %s43 = scalar_select %p40, %s41, %s42
      %p46 = pneg %p40
      %p47 = scmp.eq.s32.totalorder %s17, 1
      %p48 = por %p46, %p47
      %p49 = scmp.ne.s32.totalorder %s41, %s44
      %p50 = scmp.eq.s32.totalorder %s17, 0
      %p51 = por %p49, %p50
      %p52 = scmp.ne.s32.totalorder %s41, %s44
      %p53 = scmp.eq.s32.totalorder %s22, 1
      %p54 = por %p52, %p53
      %p55 = scmp.ne.s32.totalorder %s44, %s45
      %p56 = scmp.eq.s32.totalorder %s22, 0
      %p57 = por %p55, %p56
      %p58 = scmp.ne.s32.totalorder %s44, %s45
      %p59 = scmp.eq.s32.totalorder %s23, 1
      %p60 = por %p58, %p59
      %p62 = scmp.ne.s32.totalorder %s45, %s61
      %p63 = scmp.eq.s32.totalorder %s23, 0
      %p64 = por %p62, %p63
      %s66 = sadd.s32 %s65, 1
      %p69 = scmp.eq.s32.totalorder %s17, 1
      %p70 = scmp.ne.s32.totalorder %s65, %s67
      %p71 = scmp.eq.s32.totalorder %s17, 0
      %p72 = por %p70, %p71
      %p73 = scmp.ne.s32.totalorder %s65, %s67
      %p74 = scmp.eq.s32.totalorder %s22, 1
      %p75 = por %p73, %p74
      %p76 = scmp.ne.s32.totalorder %s67, %s68
      %p77 = scmp.eq.s32.totalorder %s22, 0
      %p78 = por %p76, %p77
      %p79 = scmp.ne.s32.totalorder %s67, %s68
      %p80 = scmp.eq.s32.totalorder %s23, 1
      %p81 = por %p79, %p80
      %p83 = scmp.ne.s32.totalorder %s68, %s82
      %p84 = scmp.eq.s32.totalorder %s23, 0
      %p85 = por %p83, %p84
      %s87 = sadd.s32 %s86, 1
      %p90 = scmp.eq.s32.totalorder %s17, 1
      %p91 = scmp.ne.s32.totalorder %s86, %s88
      %p92 = scmp.eq.s32.totalorder %s17, 0
      %p93 = por %p91, %p92
      %p94 = scmp.ne.s32.totalorder %s86, %s88
      %p95 = scmp.eq.s32.totalorder %s22, 1
      %p96 = por %p94, %p95
      %p97 = scmp.ne.s32.totalorder %s88, %s89
      %p98 = scmp.eq.s32.totalorder %s22, 0
      %p99 = por %p97, %p98
      %p100 = scmp.ne.s32.totalorder %s88, %s89
      %p101 = scmp.eq.s32.totalorder %s23, 1
      %p102 = por %p100, %p101
      %p104 = scmp.ne.s32.totalorder %s89, %s103
      %p105 = scmp.eq.s32.totalorder %s23, 0
      %p106 = por %p104, %p105
      %s107 = ssub.s32 %s24, %s36
      %s108 = ssub.s32 %s25, %s32
      %s109 = sor.u32 %s107, %s108
      %p110 = scmp.eq.s32.totalorder %s109, 0
      %s112 = sadd.s32 %s111, 1
      %s113 = scalar_select %p110, %s111, %s112
      %p116 = pneg %p110
      %p117 = scmp.eq.s32.totalorder %s17, 1
      %p118 = por %p116, %p117
      %p119 = scmp.ne.s32.totalorder %s111, %s114
      %p120 = scmp.eq.s32.totalorder %s17, 0
      %p121 = por %p119, %p120
      %p122 = scmp.ne.s32.totalorder %s111, %s114
      %p123 = scmp.eq.s32.totalorder %s22, 1
      %p124 = por %p122, %p123
      %p125 = scmp.ne.s32.totalorder %s114, %s115
      %p126 = scmp.eq.s32.totalorder %s22, 0
      %p127 = por %p125, %p126
      %p128 = scmp.ne.s32.totalorder %s114, %s115
      %p129 = scmp.eq.s32.totalorder %s23, 1
      %p130 = por %p128, %p129
      %p132 = scmp.ne.s32.totalorder %s115, %s131
      %p133 = scmp.eq.s32.totalorder %s23, 0
      %p134 = por %p132, %p133
      %p135 = scmp.le.s32.totalorder 1, %s17
      %p136 = scmp.lt.s32.totalorder %s17, 3
      %p137 = pnand %p135, %p136
      %p138 = pneg %p137
      // Predicated region
      $region9: #{tpu_custom_call.1} parent=5 // pred_check
        _
      $region10: #{tpu_custom_call.1} parent=5 // pred_check_branch
        %140 = sbr.rel (%p137) target = $region12
      $region11: #{tpu_custom_call.1} parent=5 // pred_region
        %s141 = ssub.s32 %s17, 1
        // Predicated region
        $region13: #{tpu_custom_call.1} parent=11 // pred_check
          %p142 = pneg %p78
        $region14: #{tpu_custom_call.1} parent=11 // pred_check_branch
          %144 = sbr.rel (%p142) target = $region16
        $region15: #{tpu_custom_call.1} parent=11 // pred_region
          %s146 = ssub.s32 16, 16
          %147 = vsyncadd [#allocation5], %s146
          %s149 = sshll.u32 %s1, 4
          %s150 = int_to_ptr.vmem [resolvable:$true] %s149
          %152 = dma.vmem_to_smem %s150, 16, [#allocation6], [#allocation5]
        $region16: #{tpu_custom_call.1} parent=11 // pred_fallthru
          _
        // Predicated region
        $region17: #{tpu_custom_call.1} parent=11 // pred_check
          %p153 = pneg %p99
        $region18: #{tpu_custom_call.1} parent=11 // pred_check_branch
          %155 = sbr.rel (%p153) target = $region20
        $region19: #{tpu_custom_call.1} parent=11 // pred_region
          %s157 = ssub.s32 16, 16
          %158 = vsyncadd [#allocation8], %s157
          %s160 = sshll.u32 %s2, 4
          %s161 = int_to_ptr.vmem [resolvable:$true] %s160
          %163 = dma.vmem_to_smem %s161, 16, [#allocation7], [#allocation8]
        $region20: #{tpu_custom_call.1} parent=11 // pred_fallthru
          _
      $region12: #{tpu_custom_call.1} parent=5 // pred_fallthru
        _
      %p164 = scmp.lt.s32.totalorder %s17, 2
      // Predicated region
      $region21: #{tpu_custom_call.1} parent=5 // pred_check
        %p165 = pneg %p164
      $region22: #{tpu_custom_call.1} parent=5 // pred_check_branch
        %167 = sbr.rel (%p165) target = $region24
      $region23: #{tpu_custom_call.1} parent=5 // pred_region
        // Predicated region
        $region25: #{tpu_custom_call.1} parent=23 // pred_check
          %p168 = pneg %p51
        $region26: #{tpu_custom_call.1} parent=23 // pred_check_branch
          %170 = sbr.rel (%p168) target = $region28
        $region27: #{tpu_custom_call.1} parent=23 // pred_region
          %s171 = sand.u32 %s41, 1
          %s172 = scalar_lea.sflag [#allocation3], %s171
          %s173 = sand.u32 %s41, 1
          %s174 = smul.addr %s173, 4
          %s175 = scalar_lea.vmem [#allocation2], %s174
          %s177 = ssub.s32 64, 64
          %178 = vsyncadd %s172, %s177
          %s179 = sadd.s32 %s25, %s24
          %s180 = smul.addr %s179, 64
          %s181 = scalar_lea.hbm %s0, %s180
          %s183 = sshll.u32 %s175, 4
          %s184 = int_to_ptr.vmem [resolvable:$true] %s183
          %186 = dma.hbm_to_vmem [thread:$0]  %s181, 64, %s184, %s172
        $region28: #{tpu_custom_call.1} parent=23 // pred_fallthru
          _
      $region24: #{tpu_custom_call.1} parent=5 // pred_fallthru
        _
      %p187 = scmp.le.s32.totalorder 1, %s17
      %p188 = scmp.lt.s32.totalorder %s17, 3
      %p189 = pnand %p187, %p188
      %p190 = pneg %p189
      // Predicated region
      $region29: #{tpu_custom_call.1} parent=5 // pred_check
        _
      $region30: #{tpu_custom_call.1} parent=5 // pred_check_branch
        %192 = sbr.rel (%p189) target = $region32
      $region31: #{tpu_custom_call.1} parent=5 // pred_region
        %s193 = ssub.s32 %s17, 1
        %s194 = sand.u32 %s44, 1
        %s195 = scalar_lea.sflag [#allocation3], %s194
        %s196 = sand.u32 %s44, 1
        %s197 = smul.addr %s196, 4
        %s198 = scalar_lea.vmem [#allocation2], %s197
        // Predicated region
        $region33: #{tpu_custom_call.1} parent=31 // pred_check
          %p199 = pneg %p57
        $region34: #{tpu_custom_call.1} parent=31 // pred_check_branch
          %201 = sbr.rel (%p199) target = $region36
        $region35: #{tpu_custom_call.1} parent=31 // pred_region
          %202 = dma.done %s195, 64
        $region36: #{tpu_custom_call.1} parent=31 // pred_fallthru
          _
        // Predicated region
        $region37: #{tpu_custom_call.1} parent=31 // pred_check
          %p203 = pneg %p78
        $region38: #{tpu_custom_call.1} parent=31 // pred_check_branch
          %205 = sbr.rel (%p203) target = $region40
        $region39: #{tpu_custom_call.1} parent=31 // pred_region
          %206 = dma.done [#allocation5], 16
        $region40: #{tpu_custom_call.1} parent=31 // pred_fallthru
          _
        // Predicated region
        $region41: #{tpu_custom_call.1} parent=31 // pred_check
          %p207 = pneg %p99
        $region42: #{tpu_custom_call.1} parent=31 // pred_check_branch
          %209 = sbr.rel (%p207) target = $region44
        $region43: #{tpu_custom_call.1} parent=31 // pred_region
          %210 = dma.done [#allocation8], 16
        $region44: #{tpu_custom_call.1} parent=31 // pred_fallthru
          _
        %211 = sfence
        %s212 = sand.u32 %s44, 1
        %s213 = scalar_lea.sflag [#allocation3], %s212
        %s214 = sand.u32 %s44, 1
        %s215 = smul.addr %s214, 4
        %s216 = scalar_lea.vmem [#allocation2], %s215
        %p217 = pneg %p57
        %p218 = pneg %p54
        %p219 = pneg %p78
        %p220 = pneg %p75
        %p221 = pneg %p99
        %p222 = pneg %p96
        %p223 = pneg %p127
        %p224 = pneg %p124
        %s225 = sand.u32 %s114, 1
        %s226 = scalar_lea.sflag [#allocation4], %s225
        %s227 = sand.u32 %s114, 1
        %s228 = smul.addr %s227, 4
        %s229 = scalar_lea.vmem [#allocation9], %s228
        %v230 = vld [vmem:[%s198] sm:$0xf]
        %vm231 = vcmask 125952
        %v232 = vsel %vm231, %v230, 0.0
        %v233 = vrot.slane %v232, 4
        %v234 = vadd.f32 %v232, %v233
        %v235 = vrot.slane %v234, 2
        %v236 = vadd.f32 %v234, %v235
        %v237 = vrot.slane %v236, 1
        %v238 = vadd.f32 %v236, %v237
        %v239 = vsel %vm231, %v230, -inf
        %v240 = vrot.slane %v239, 4
        %v241 = vmax.f32 %v239, %v240
        %v242 = vrot.slane %v241, 2
        %v243 = vmax.f32 %v241, %v242
        %v244 = vrot.slane %v243, 1
        %v245 = vmax.f32 %v243, %v244
        %247 = vrot.lane.b32.xlu0 %v238, 1
        %v248 = vpop.permute.xlu0 %247
        %vm250 = vcmask 7168
        %v251 = vsel %vm250, 0.0, %v248
        %vm252 = vcmask 138240
        %v253 = vsel %vm252, %v251, 0.0
        %255 = vrot.lane.b32.xlu0 %v245, 1
        %v256 = vpop.permute.xlu0 %255
        %v258 = vsel %vm250, 0.0, %v256
        %v259 = vsel %vm252, %v258, 0.0
        %s260 = sld [smem:[#allocation6]]
        %v261 = vstv %s260
        %v262 = vmul.f32 %v261, %v253
        %v263 = vadd.f32 %v262, 0.0
        %s264 = sld [smem:[#allocation6 + $0x3]]
        %v265 = vstv %s264
        %v266 = vmul.f32 %v265, %v259
        %v267 = vadd.f32 %v263, %v266
        %s268 = sld [smem:[#allocation6 + $0x6]]
        %v269 = vstv %s268
        %v270 = vmul.f32 %v269, %v253
        %v271 = vadd.f32 %v270, 0.0
        %s272 = sld [smem:[#allocation6 + $0x9]]
        %v273 = vstv %s272
        %v274 = vmul.f32 %v273, %v259
        %v275 = vadd.f32 %v271, %v274
        %s276 = sld [smem:[#allocation6 + $0xc]]
        %v277 = vstv %s276
        %v278 = vmul.f32 %v277, %v253
        %v279 = vadd.f32 %v278, 0.0
        %s280 = sld [smem:[#allocation6 + $0xf]]
        %v281 = vstv %s280
        %v282 = vmul.f32 %v281, %v259
        %v283 = vadd.f32 %v279, %v282
        %s284 = sld [smem:[#allocation6 + $0x12]]
        %v285 = vstv %s284
        %v286 = vmul.f32 %v285, %v253
        %v287 = vadd.f32 %v286, 0.0
        %s288 = sld [smem:[#allocation6 + $0x15]]
        %v289 = vstv %s288
        %v290 = vmul.f32 %v289, %v259
        %v291 = vadd.f32 %v287, %v290
        %s292 = sld [smem:[#allocation6 + $0x1]]
        %v293 = vstv %s292
        %v294 = vmul.f32 %v293, %v253
        %296 = vrot.lane.b32.xlu0 %v294, 127
        %v297 = vpop.permute.xlu0 %296
        %v299 = vadd.f32 %v267, %v297
        %s300 = sld [smem:[#allocation6 + $0x4]]
        %v301 = vstv %s300
        %v302 = vmul.f32 %v301, %v259
        %304 = vrot.lane.b32.xlu0 %v302, 127
        %v305 = vpop.permute.xlu0 %304
        %v307 = vadd.f32 %v299, %v305
        %s308 = sld [smem:[#allocation6 + $0x7]]
        %v309 = vstv %s308
        %v310 = vmul.f32 %v309, %v253
        %312 = vrot.lane.b32.xlu0 %v310, 127
        %v313 = vpop.permute.xlu0 %312
        %v315 = vadd.f32 %v275, %v313
        %s316 = sld [smem:[#allocation6 + $0xa]]
        %v317 = vstv %s316
        %v318 = vmul.f32 %v317, %v259
        %320 = vrot.lane.b32.xlu0 %v318, 127
        %v321 = vpop.permute.xlu0 %320
        %v323 = vadd.f32 %v315, %v321
        %s324 = sld [smem:[#allocation6 + $0xd]]
        %v325 = vstv %s324
        %v326 = vmul.f32 %v325, %v253
        %328 = vrot.lane.b32.xlu0 %v326, 127
        %v329 = vpop.permute.xlu0 %328
        %v331 = vadd.f32 %v283, %v329
        %s332 = sld [smem:[#allocation6 + $0x10]]
        %v333 = vstv %s332
        %v334 = vmul.f32 %v333, %v259
        %336 = vrot.lane.b32.xlu0 %v334, 127
        %v337 = vpop.permute.xlu0 %336
        %v339 = vadd.f32 %v331, %v337
        %s340 = sld [smem:[#allocation6 + $0x13]]
        %v341 = vstv %s340
        %v342 = vmul.f32 %v341, %v253
        %344 = vrot.lane.b32.xlu0 %v342, 127
        %v345 = vpop.permute.xlu0 %344
        %v347 = vadd.f32 %v291, %v345
        %s348 = sld [smem:[#allocation6 + $0x16]]
        %v349 = vstv %s348
        %v350 = vmul.f32 %v349, %v259
        %352 = vrot.lane.b32.xlu0 %v350, 127
        %v353 = vpop.permute.xlu0 %352
        %v355 = vadd.f32 %v347, %v353
        %s356 = sld [smem:[#allocation6 + $0x2]]
        %v357 = vstv %s356
        %v358 = vmul.f32 %v357, %v253
        %360 = vrot.lane.b32.xlu0 %v358, 126
        %v361 = vpop.permute.xlu0 %360
        %v363 = vadd.f32 %v307, %v361
        %s364 = sld [smem:[#allocation6 + $0x5]]
        %v365 = vstv %s364
        %v366 = vmul.f32 %v365, %v259
        %368 = vrot.lane.b32.xlu0 %v366, 126
        %v369 = vpop.permute.xlu0 %368
        %v371 = vadd.f32 %v363, %v369
        %s372 = sld [smem:[#allocation6 + $0x8]]
        %v373 = vstv %s372
        %v374 = vmul.f32 %v373, %v253
        %376 = vrot.lane.b32.xlu0 %v374, 126
        %v377 = vpop.permute.xlu0 %376
        %v379 = vadd.f32 %v323, %v377
        %s380 = sld [smem:[#allocation6 + $0xb]]
        %v381 = vstv %s380
        %v382 = vmul.f32 %v381, %v259
        %384 = vrot.lane.b32.xlu0 %v382, 126
        %v385 = vpop.permute.xlu0 %384
        %v387 = vadd.f32 %v379, %v385
        %s388 = sld [smem:[#allocation6 + $0xe]]
        %v389 = vstv %s388
        %v390 = vmul.f32 %v389, %v253
        %392 = vrot.lane.b32.xlu0 %v390, 126
        %v393 = vpop.permute.xlu0 %392
        %v395 = vadd.f32 %v339, %v393
        %s396 = sld [smem:[#allocation6 + $0x11]]
        %v397 = vstv %s396
        %v398 = vmul.f32 %v397, %v259
        %400 = vrot.lane.b32.xlu0 %v398, 126
        %v401 = vpop.permute.xlu0 %400
        %v403 = vadd.f32 %v395, %v401
        %s404 = sld [smem:[#allocation6 + $0x14]]
        %v405 = vstv %s404
        %v406 = vmul.f32 %v405, %v253
        %408 = vrot.lane.b32.xlu0 %v406, 126
        %v409 = vpop.permute.xlu0 %408
        %v411 = vadd.f32 %v355, %v409
        %s412 = sld [smem:[#allocation6 + $0x17]]
        %v413 = vstv %s412
        %v414 = vmul.f32 %v413, %v259
        %416 = vrot.lane.b32.xlu0 %v414, 126
        %v417 = vpop.permute.xlu0 %416
        %v419 = vadd.f32 %v411, %v417
        %s420 = sld [smem:[#allocation7]]
        %v421 = vstv %s420
        %v422 = vadd.f32 %v371, %v421
        %v423 = vxor.u32 %v422, 2147483648
        %v424 = vmul.f32 %v423, 1.442695
        %v425 = vpow.pop %v424
        %v426 = vadd.f32 %v425, 1.0
        %v427 = vrcp.pop %v426
        %v428 = vmul.f32 1.0, %v427
        %vm429 = vcmask 122880
        %430 = vst.msk [vmem:[%s229] sm:$0x1] %vm429, %v428
        %s431 = sld [smem:[#allocation7 + $0x1]]
        %v432 = vstv %s431
        %v433 = vadd.f32 %v387, %v432
        %v434 = vxor.u32 %v433, 2147483648
        %v435 = vmul.f32 %v434, 1.442695
        %v436 = vpow.pop %v435
        %v437 = vadd.f32 %v436, 1.0
        %v438 = vrcp.pop %v437
        %v439 = vmul.f32 1.0, %v438
        %440 = vst.msk [vmem:[%s229 + $0x1] sm:$0x1] %vm429, %v439
        %s441 = sld [smem:[#allocation7 + $0x2]]
        %v442 = vstv %s441
        %v443 = vadd.f32 %v403, %v442
        %v444 = vxor.u32 %v443, 2147483648
        %v445 = vmul.f32 %v444, 1.442695
        %v446 = vpow.pop %v445
        %v447 = vadd.f32 %v446, 1.0
        %v448 = vrcp.pop %v447
        %v449 = vmul.f32 1.0, %v448
        %450 = vst.msk [vmem:[%s229 + $0x2] sm:$0x1] %vm429, %v449
        %s451 = sld [smem:[#allocation7 + $0x3]]
        %v452 = vstv %s451
        %v453 = vadd.f32 %v419, %v452
        %v454 = vxor.u32 %v453, 2147483648
        %v455 = vmul.f32 %v454, 1.442695
        %v456 = vpow.pop %v455
        %v457 = vadd.f32 %v456, 1.0
        %v458 = vrcp.pop %v457
        %v459 = vmul.f32 1.0, %v458
        %460 = vst.msk [vmem:[%s229 + $0x3] sm:$0x1] %vm429, %v459
        %s461 = sand.u32 %s114, 1
        %s462 = scalar_lea.sflag [#allocation4], %s461
        %s463 = sand.u32 %s114, 1
        %s464 = smul.addr %s463, 4
        %s465 = scalar_lea.vmem [#allocation9], %s464
        // Predicated region
        $region45: #{tpu_custom_call.1} parent=31 // pred_check
          %p466 = pneg %p124
        $region46: #{tpu_custom_call.1} parent=31 // pred_check_branch
          %468 = sbr.rel (%p466) target = $region48
        $region47: #{tpu_custom_call.1} parent=31 // pred_region
          %s470 = ssub.s32 64, 64
          %471 = vsyncadd %s462, %s470
          %s472 = sadd.s32 %s27, %s26
          %s473 = smul.addr %s472, 64
          %s474 = scalar_lea.hbm %s3, %s473
          %s476 = sshll.u32 %s465, 4
          %s477 = int_to_ptr.vmem [resolvable:$true] %s476
          %479 = dma.vmem_to_hbm [thread:$0]  %s477, 64, %s474, %s462
        $region48: #{tpu_custom_call.1} parent=31 // pred_fallthru
          _
      $region32: #{tpu_custom_call.1} parent=5 // pred_fallthru
        _
      %p480 = scmp.le.s32.totalorder 2, %s17
      // Predicated region
      $region49: #{tpu_custom_call.1} parent=5 // pred_check
        %p481 = pneg %p480
      $region50: #{tpu_custom_call.1} parent=5 // pred_check_branch
        %483 = sbr.rel (%p481) target = $region52
      $region51: #{tpu_custom_call.1} parent=5 // pred_region
        %s484 = ssub.s32 %s17, 2
        // Predicated region
        $region53: #{tpu_custom_call.1} parent=51 // pred_check
          %p485 = pneg %p130
        $region54: #{tpu_custom_call.1} parent=51 // pred_check_branch
          %487 = sbr.rel (%p485) target = $region56
        $region55: #{tpu_custom_call.1} parent=51 // pred_region
          %s488 = sand.u32 %s115, 1
          %s489 = scalar_lea.sflag [#allocation4], %s488
          %s490 = sand.u32 %s115, 1
          %s491 = smul.addr %s490, 4
          %s492 = scalar_lea.vmem [#allocation9], %s491
          %493 = dma.done %s489, 64
        $region56: #{tpu_custom_call.1} parent=51 // pred_fallthru
          _
      $region52: #{tpu_custom_call.1} parent=5 // pred_fallthru
        _
    $region6: #{tpu_custom_call.1} parent=1 // loop_footer
      %s21 = sadd.s32 1, %s17
    $region7: #{tpu_custom_call.1} parent=1 // loop_footer_branch
      %16 = sbr.rel target = $region3
    $region8: #{tpu_custom_call.1} parent=1 // loop_exit
      _
    %494 = vsyncpa [#allocation3], 1
    %s495 = scalar_lea.sflag [#allocation3], 1
    %496 = vsyncpa %s495, 1
    %497 = vsyncpa [#allocation4], 1
    %s498 = scalar_lea.sflag [#allocation4], 1
    %499 = vsyncpa %s498, 1
    %500 = vsyncpa [#allocation5], 1
    %s501 = scalar_lea.sflag [#allocation5], 1
    %502 = vsyncpa %s501, 1
    %503 = vsyncpa [#allocation8], 1

</llo_original>
